<compile_context>
chip_gen: v5e
topology: v5e:2x2
jax: 0.10.0
libtpu: 0.0.40
codegen_flags: <defaults>
</compile_context>

<pallas_src>
import math

import jax
import jax.numpy as jnp
from jax import lax
from jax.experimental import pallas as pl
from jax.experimental.pallas import tpu as pltpu


# ----------------------------------------------------------------------------
# Pallas kernel: the hot path of compute_score().
#
# Previous version streamed BOTH x and x_gathered = x[snn_max] ((N,F) each)
# through the kernel, and the XLA gather itself cost another (N,F) read+write.
# This version streams x exactly ONCE and emits per-node statistics:
#   cross[i, :] = x_i . kc_j                  (one small MXU matmul per tile)
#   xx[i]       = ||x_i||^2,  xs[i] = sum(x_i)
#   zc_min[i]   = min_j euclidean_dist(x_i, kc_j)   (clamp 1e-12, sqrt)
#   zc_idx[i]   = first argmin_j (torch.min semantics)
# The snn_max-dependent pairwise_distance is then reconstructed in a tiny
# O(N*K) JAX epilogue by gathering those statistics (never the (N,F) rows):
#   ||xg - kc_sel + eps||^2 = ||xg||^2 + ||kc_sel||^2 - 2 xg.kc_sel
#                             + 2*eps*(sum xg - sum kc_sel) + F*eps^2
# which matches torch F.pairwise_distance's per-element eps=1e-6 exactly.
# Net effect: ~3-4x less HBM traffic vs the fused two-stream design.
#
# Other decisions kept from the feedback-driven version:
#   * row tile VMEM-budgeted (multiple of 8, up to 1024), N padded to a tile
#     multiple (no shape asserts), padded rows sliced off
#   * inputs stream in their native dtype; f32 VPU/MXU math happens in-kernel
#   * ||kc||^2 hoisted out of the grid loop into a tiny resident aux input
#   * explicit vmem_limit_bytes + "parallel" grid axis (2-TC sharding on v7x)
# ----------------------------------------------------------------------------
_EPS_PAIR = 1e-6


def _node_stats_kernel(x_ref, kc_ref, kk_ref, cross_ref, stats_ref):
    f32 = jnp.float32
    x = x_ref[...].astype(f32)            # (TN, F) tile of node features
    kc = kc_ref[...].astype(f32)          # (K,  F) cluster means (resident)
    kk = kk_ref[...].astype(f32)          # (1,  K) hoisted ||kc||^2
    k = kc.shape[0]

    # Cross term: one small MXU matmul against the resident kc tile.
    cross = jnp.dot(x, kc.T, preferred_element_type=f32)      # (TN, K)
    xx = jnp.sum(x * x, axis=1, keepdims=True)                # (TN, 1)
    xs = jnp.sum(x, axis=1, keepdims=True)                    # (TN, 1)

    # euclidean_dist(x, kc) = sqrt(clamp(||x||^2 + ||kc||^2 - 2 x.kc, 1e-12))
    d2 = xx + kk - 2.0 * cross
    dist = jnp.sqrt(jnp.maximum(d2, 1e-12))

    # torch.min semantics: value + first argmin over clusters.
    zc_min = jnp.min(dist, axis=1, keepdims=True)             # (TN, 1)
    iota = lax.broadcasted_iota(jnp.int32, dist.shape, 1)
    zc_idx = jnp.min(jnp.where(dist == zc_min, iota, k), axis=1, keepdims=True)

    cross_ref[...] = cross
    stats_ref[...] = jnp.concatenate(
        [xx, xs, zc_min, zc_idx.astype(f32)], axis=1)         # (TN, 4)


def _round_up(a, m):
    return ((a + m - 1) // m) * m


def _choose_tn(n, f, k, in_itemsize, tn_max, vmem_budget_bytes):
    """Largest row tile (multiple of 8, <= tn_max) whose double-buffered
    input/output blocks fit comfortably inside scoped VMEM on v5e/v6e/v7x."""
    tn = _round_up(min(int(tn_max), _round_up(n, 8)), 8)

    def bytes_needed(t):
        ins = 2 * t * f * in_itemsize        # double-buffered x tile
        outs = 2 * t * (k + 4) * 4           # double-buffered f32 outputs
        return ins + outs

    while tn > 8 and bytes_needed(tn) > vmem_budget_bytes:
        tn = max(8, _round_up(tn // 2, 8))
    return tn


def kpool_score(x, snn_max, kc, *, tn=1024):
    """score[i] = 10 - pairdist(x[snn_max[i]], kc[argmin_j d(x_i,kc_j)]) - min_j d(x_i,kc_j)."""
    n, f = x.shape
    kc = kc.astype(jnp.float32)
    k = kc.shape[0]
    # Hoisted cluster-invariant reductions (computed once).
    kk = jnp.sum(kc * kc, axis=1)[None, :]                    # (1, K) f32
    kcsum = jnp.sum(kc, axis=1)                               # (K,)  f32

    in_itemsize = jnp.dtype(x.dtype).itemsize
    tn_eff = _choose_tn(n, f, k, in_itemsize, tn_max=tn,
                        vmem_budget_bytes=20 * 1024 * 1024)
    n_pad = _round_up(n, tn_eff)
    x_p = jnp.pad(x, ((0, n_pad - n), (0, 0))) if n_pad != n else x

    cross, stats = pl.pallas_call(
        _node_stats_kernel,
        out_shape=(jax.ShapeDtypeStruct((n_pad, k), jnp.float32),
                   jax.ShapeDtypeStruct((n_pad, 4), jnp.float32)),
        grid=(n_pad // tn_eff,),
        in_specs=[
            pl.BlockSpec((tn_eff, f), lambda i: (i, 0)),      # x tile (native dtype)
            pl.BlockSpec((k, f), lambda i: (0, 0)),           # all cluster means (resident)
            pl.BlockSpec((1, k), lambda i: (0, 0)),           # hoisted ||kc||^2
        ],
        out_specs=(pl.BlockSpec((tn_eff, k), lambda i: (i, 0)),
                   pl.BlockSpec((tn_eff, 4), lambda i: (i, 0))),
        compiler_params=pltpu.CompilerParams(
            dimension_semantics=("parallel",),      # shards grid across both TCs on v7x
            vmem_limit_bytes=32 * 1024 * 1024,      # explicit; raises v5e's 16 MiB default
        ),
    )(x_p, kc, kk)

    cross = cross[:n]                       # (N, K)
    stats = stats[:n]                       # (N, 4)
    xx = stats[:, 0]
    xs = stats[:, 1]
    zc_min = stats[:, 2]
    zc_idx = stats[:, 3].astype(jnp.int32)  # exact: small integer values in f32

    # Tiny O(N*K) epilogue: gather per-node stats instead of (N,F) rows.
    g = snn_max.astype(jnp.int32)
    sel_cross = cross[g, zc_idx]            # x[snn_max[i]] . kc[zc_idx[i]]
    xg_sq = xx[g]
    xg_sum = xs[g]
    sel_kk = kk[0][zc_idx]
    sel_ks = kcsum[zc_idx]
    pair2 = (xg_sq + sel_kk - 2.0 * sel_cross
             + 2.0 * _EPS_PAIR * (xg_sum - sel_ks)
             + f * (_EPS_PAIR * _EPS_PAIR))
    pair = jnp.sqrt(jnp.maximum(pair2, 0.0))
    return 10.0 - pair - zc_min


# ----------------------------------------------------------------------------
# Plain-JAX glue replicating the rest of KPooling.forward
# ----------------------------------------------------------------------------
def _kmeans_means(x, n_clusters, iters=10):
    # TODO(synk): reference uses sklearn-style GMM(EM).fit means; replaced with a
    # deterministic fixed-iteration k-means (Lloyd) seeded from the first K rows.
    x = x.astype(jnp.float32)
    means = x[:n_clusters]
    xx = jnp.sum(x * x, axis=1, keepdims=True)                   # (N, 1), loop-invariant
    for _ in range(iters):
        # ||x||^2 + ||c||^2 - 2 x@c^T  (no (N,K,F) broadcast materialized)
        cc = jnp.sum(means * means, axis=1)[None, :]              # (1, K)
        d2 = xx + cc - 2.0 * (x @ means.T)                        # (N, K)
        assign = jnp.argmin(d2, axis=1)
        oh = jax.nn.one_hot(assign, n_clusters, dtype=jnp.float32)  # (N, K)
        counts = oh.sum(0)[:, None]
        sums = oh.T @ x
        means = jnp.where(counts > 0, sums / jnp.maximum(counts, 1.0), means)
    return means


def _topk_single_graph(score, ratio):
    # batch is all-zeros in forward() -> one graph; topk reduces to argsort.
    n = score.shape[0]
    k = int(math.ceil(ratio * n))
    perm = jnp.argsort(-score)[:k]
    return perm.astype(jnp.int32)


def _filter_adj(edge_index, perm, num_nodes):
    k = perm.shape[0]
    mask = jnp.full((num_nodes,), -1, dtype=jnp.int32).at[perm].set(
        jnp.arange(k, dtype=jnp.int32))
    row = mask[edge_index[0]]
    col = mask[edge_index[1]]
    keep = (row >= 0) & (col >= 0)           # dynamic-size result: eager only
    return jnp.stack([row[keep], col[keep]], axis=0)


class KPooling:
    def __init__(self, in_channels, n_clusters, ratio=0.6):
        self.in_channels = in_channels
        self.n_clusters = n_clusters
        self.ratio = ratio
        # Parameters declared by the torch module (GAT / linear / weight) are
        # NOT used in its forward pass; initialize deterministically for shape
        # fidelity only.
        kw, kl = jax.random.split(jax.random.PRNGKey(42))
        self.weight = jax.random.normal(kw, (1, in_channels), jnp.float32) * 0.1
        self.linear_w = jax.random.normal(kl, (1, in_channels * 4), jnp.float32) * 0.1
        self.linear_b = jnp.zeros((1,), jnp.float32)
        # TODO(synk): GATConv sub-module is constructed but never invoked in
        # forward(); omitted.

    def __call__(self, x, edge_index, snn_max):
        n = x.shape[0]
        kc = _kmeans_means(x, self.n_clusters)            # GMM-means proxy
        score = kpool_score(x, snn_max, kc)               # Pallas hot path
        perm = _topk_single_graph(score, self.ratio)
        x_out = x[perm]                                   # (xr is unused/unreturned in torch)
        ei_out = _filter_adj(edge_index, perm, num_nodes=n)
        return x_out, ei_out, perm


if __name__ == "__main__":
    N, F, K, E = 16, 32, 4, 40
    key = jax.random.PRNGKey(0)
    kx, ke, ks = jax.random.split(key, 3)

    x = jax.random.normal(kx, (N, F), jnp.float32)
    edge_index = jax.random.randint(ke, (2, E), 0, N, dtype=jnp.int32)
    snn_max = jax.random.randint(ks, (N,), 0, N, dtype=jnp.int32)

    pool = KPooling(in_channels=F, n_clusters=K, ratio=0.6)
    x_out, ei_out, perm = pool(x, edge_index, snn_max)
    jax.block_until_ready((x_out, ei_out, perm))

    assert x_out.shape == (int(math.ceil(0.6 * N)), F)
    assert perm.shape[0] == x_out.shape[0]
    assert ei_out.shape[0] == 2
    print("KERNEL_OK")
</pallas_src>

<mosaic_0001>
module attributes {stable_mosaic.version = 11 : i64} {
  func.func @_node_stats_kernel(%arg0: i32, %arg1: memref<16x32xf32, #tpu.memory_space<vmem>>, %arg2: memref<4x32xf32, #tpu.memory_space<vmem>>, %arg3: memref<1x4xf32, #tpu.memory_space<vmem>>, %arg4: memref<16x4xf32, #tpu.memory_space<vmem>>, %arg5: memref<16x4xf32, #tpu.memory_space<vmem>>) attributes {dimension_semantics = [#tpu.dimension_semantics<parallel>], iteration_bounds = array<i64: 1>, scalar_prefetch = 0 : i64, scratch_operands = 0 : i64, tpu.core_type = #tpu.core_type<tc>, window_params = [{transform_indices = @transform_0, window_bounds = array<i64: 16, 32>}, {pipeline_mode = #tpu.pipeline_mode<synchronous>, transform_indices = @transform_1, window_bounds = array<i64: 4, 32>}, {pipeline_mode = #tpu.pipeline_mode<synchronous>, transform_indices = @transform_2, window_bounds = array<i64: 1, 4>}, {transform_indices = @transform_3, window_bounds = array<i64: 16, 4>}, {transform_indices = @transform_4, window_bounds = array<i64: 16, 4>}]} {
    %c0 = arith.constant 0 : index
    %c0_0 = arith.constant 0 : index
    %0 = vector.load %arg1[%c0, %c0_0] : memref<16x32xf32, #tpu.memory_space<vmem>>, vector<16x32xf32>
    %c0_1 = arith.constant 0 : index
    %c0_2 = arith.constant 0 : index
    %1 = vector.load %arg2[%c0_1, %c0_2] : memref<4x32xf32, #tpu.memory_space<vmem>>, vector<4x32xf32>
    %c0_3 = arith.constant 0 : index
    %c0_4 = arith.constant 0 : index
    %2 = vector.load %arg3[%c0_3, %c0_4] : memref<1x4xf32, #tpu.memory_space<vmem>>, vector<1x4xf32>
    %3 = tpu.transpose %1, [1, 0] : vector<4x32xf32> -> vector<32x4xf32>
    %cst = arith.constant dense<0.000000e+00> : vector<16x4xf32>
    %4 = tpu.matmul %0, %3, %cst {dimension_numbers = #tpu.dot_dimension_numbers<[1], [0], [0], [1], [0, 0, 1, 1], [], []>} : vector<16x32xf32>, vector<32x4xf32>, vector<16x4xf32> -> vector<16x4xf32>
    %5 = arith.mulf %0, %0 : vector<16x32xf32>
    %cst_5 = arith.constant dense<0.000000e+00> : vector<16xf32>
    %6 = vector.multi_reduction <add>, %5, %cst_5 [1] : vector<16x32xf32> to vector<16xf32>
    %7 = vector.shape_cast %6 : vector<16xf32> to vector<16x1xf32>
    %cst_6 = arith.constant dense<0.000000e+00> : vector<16xf32>
    %8 = vector.multi_reduction <add>, %0, %cst_6 [1] : vector<16x32xf32> to vector<16xf32>
    %9 = vector.shape_cast %8 : vector<16xf32> to vector<16x1xf32>
    %10 = vector.broadcast %7 : vector<16x1xf32> to vector<16x4xf32>
    %11 = vector.broadcast %2 : vector<1x4xf32> to vector<16x4xf32>
    %12 = arith.addf %10, %11 : vector<16x4xf32>
    %cst_7 = arith.constant 2.000000e+00 : f32
    %13 = vector.broadcast %cst_7 : f32 to vector<16x4xf32>
    %14 = arith.mulf %13, %4 : vector<16x4xf32>
    %15 = arith.subf %12, %14 : vector<16x4xf32>
    %cst_8 = arith.constant 9.99999996E-13 : f32
    %16 = vector.broadcast %cst_8 : f32 to vector<16x4xf32>
    %17 = arith.maximumf %15, %16 : vector<16x4xf32>
    %18 = math.sqrt %17 : vector<16x4xf32>
    %cst_9 = arith.constant dense<0x7F800000> : vector<16xf32>
    %19 = vector.multi_reduction <minimumf>, %18, %cst_9 [1] : vector<16x4xf32> to vector<16xf32>
    %20 = vector.shape_cast %19 : vector<16xf32> to vector<16x1xf32>
    %21 = tpu.iota {dimensions = array<i32: 1>} : vector<16x4xi32>
    %22 = vector.broadcast %20 : vector<16x1xf32> to vector<16x4xf32>
    %23 = arith.cmpf oeq, %18, %22 : vector<16x4xf32>
    %c4_i32 = arith.constant 4 : i32
    %24 = vector.broadcast %c4_i32 : i32 to vector<16x4xi32>
    %25 = arith.select %23, %21, %24 : vector<16x4xi1>, vector<16x4xi32>
    %cst_10 = arith.constant dense<2147483647> : vector<16xi32>
    %26 = vector.multi_reduction <minsi>, %25, %cst_10 [1] : vector<16x4xi32> to vector<16xi32>
    %27 = vector.shape_cast %26 : vector<16xi32> to vector<16x1xi32>
    %c0_11 = arith.constant 0 : index
    %c0_12 = arith.constant 0 : index
    %28 = vector.load %arg4[%c0_11, %c0_12] : memref<16x4xf32, #tpu.memory_space<vmem>>, vector<16x4xf32>
    tpu.vector_store %arg4[%c0_11, %c0_12], %4 {strides = array<i32>} : memref<16x4xf32, #tpu.memory_space<vmem>>, vector<16x4xf32>,
    %29 = arith.sitofp %27 : vector<16x1xi32> to vector<16x1xf32>
    %30 = tpu.concatenate %7, %9, %20, %29 in 1 : vector<16x1xf32>, vector<16x1xf32>, vector<16x1xf32>, vector<16x1xf32> -> vector<16x4xf32>
    %c0_13 = arith.constant 0 : index
    %c0_14 = arith.constant 0 : index
    %31 = vector.load %arg5[%c0_13, %c0_14] : memref<16x4xf32, #tpu.memory_space<vmem>>, vector<16x4xf32>
    tpu.vector_store %arg5[%c0_13, %c0_14], %30 {strides = array<i32>} : memref<16x4xf32, #tpu.memory_space<vmem>>, vector<16x4xf32>,
    return
  }
  func.func @transform_0(%arg0: i32) -> (i32, i32) {
    %c0_i32 = arith.constant 0 : i32
    %c0_i32_0 = arith.constant 0 : i32
    return %arg0, %c0_i32 : i32, i32
  }
  func.func @transform_1(%arg0: i32) -> (i32, i32) {
    %c0_i32 = arith.constant 0 : i32
    %c0_i32_0 = arith.constant 0 : i32
    %c0_i32_1 = arith.constant 0 : i32
    return %c0_i32, %c0_i32_0 : i32, i32
  }
  func.func @transform_2(%arg0: i32) -> (i32, i32) {
    %c0_i32 = arith.constant 0 : i32
    %c0_i32_0 = arith.constant 0 : i32
    %c0_i32_1 = arith.constant 0 : i32
    return %c0_i32, %c0_i32_0 : i32, i32
  }
  func.func @transform_3(%arg0: i32) -> (i32, i32) {
    %c0_i32 = arith.constant 0 : i32
    %c0_i32_0 = arith.constant 0 : i32
    return %arg0, %c0_i32 : i32, i32
  }
  func.func @transform_4(%arg0: i32) -> (i32, i32) {
    %c0_i32 = arith.constant 0 : i32
    %c0_i32_0 = arith.constant 0 : i32
    return %arg0, %c0_i32 : i32, i32
  }
}

</mosaic_0001>

<llo_original>
// kernel: tpu_custom_call.1
$region0: #{tpu_custom_call.1}
  #allocation0 [shape = 'u32[]', space=smem, size = 0x4, offset = 0x4, fixed_abs, tag = 'smem constant byte address 0x4 - core index']
  #allocation1 [shape = 'u32[72,128]{1,0:T(1,128)}', space=vmem, size = 0x9000, scoped, tag = 'internal scratch']
  %s0 = inlined_call_operand.hbm [shape: f32[16,32], index: 0, kind: input, shape index: {}]
  %s1 = inlined_call_operand.hbm [shape: f32[4,32], index: 1, kind: input, shape index: {}]
  %s2 = inlined_call_operand.vmem [shape: f32[1,4], index: 2, kind: input, shape index: {}]
  %s3 = inlined_call_operand.vmem [shape: f32[16,4], index: 3, kind: output, shape index: {0}]
  %s4 = inlined_call_operand.vmem [shape: f32[16,4], index: 4, kind: output, shape index: {1}]
  %5 = xla_tuple %s3, %s4
  %s6 = sld [smem:[#allocation0]]
  $region38: #{tpu_custom_call.1} parent=0
    _
  %s8 = ssub.s32 1, %s6
  %s9 = scalar_select 0, %s8, %s6
  $region1: #{tpu_custom_call.1} parent=0
    #allocation2 [shape = 'u8[8192]{0}', space=vmem, size = 0x2000, scoped, tag = 'input window, operand 0, single buffered']
    #allocation3 [shape = 's32[1]{0}', space=sflag, size = 0x4, scoped, tag = 'scoped memory for tpu_custom_call.1']
    #allocation4 [shape = 'u8[2048]{0}', space=vmem, size = 0x800, scoped, tag = 'input window, operand 1, single buffered']
    #allocation5 [shape = 's32[1]{0}', space=sflag, size = 0x4, scoped, tag = 'scoped memory for tpu_custom_call.1']
    %10 = vsyncpa [#allocation3], 0
    %11 = vsyncpa [#allocation5], 0
    // Predicated region
    $region2: #{tpu_custom_call.1} parent=1 // pred_check
      _
    $region3: #{tpu_custom_call.1} parent=1 // pred_check_branch
      %13 = sbr.rel (0) target = $region5
    $region4: #{tpu_custom_call.1} parent=1 // pred_region
      %15 = vsyncadd [#allocation3], 0
      %s16 = sshll.u32 %s0, 4
      %s17 = int_to_ptr.hbm [resolvable:$true] %s16
      %s18 = sshll.u32 [#allocation2], 4
      %s19 = int_to_ptr.vmem [resolvable:$true] %s18
      %24 = dma.hbm_to_vmem [thread:$0]  %s17, 256, %s19, [#allocation3], 128, 128, 8
    $region5: #{tpu_custom_call.1} parent=1 // pred_fallthru
      _
    // Predicated region
    $region6: #{tpu_custom_call.1} parent=1 // pred_check
      _
    $region7: #{tpu_custom_call.1} parent=1 // pred_check_branch
      %26 = sbr.rel (0) target = $region9
    $region8: #{tpu_custom_call.1} parent=1 // pred_region
      %28 = vsyncadd [#allocation5], 0
      %s30 = sshll.u32 %s1, 4
      %s31 = int_to_ptr.hbm [resolvable:$true] %s30
      %s32 = sshll.u32 [#allocation4], 4
      %s33 = int_to_ptr.vmem [resolvable:$true] %s32
      %35 = dma.hbm_to_vmem [thread:$0]  %s31, 64, %s33, [#allocation5]
    $region9: #{tpu_custom_call.1} parent=1 // pred_fallthru
      _
    // Predicated region
    $region10: #{tpu_custom_call.1} parent=1 // pred_check
      _
    $region11: #{tpu_custom_call.1} parent=1 // pred_check_branch
      %37 = sbr.rel (0) target = $region13
    $region12: #{tpu_custom_call.1} parent=1 // pred_region
      _
    $region13: #{tpu_custom_call.1} parent=1 // pred_fallthru
      _
    // Predicated region
    $region14: #{tpu_custom_call.1} parent=1 // pred_check
      _
    $region15: #{tpu_custom_call.1} parent=1 // pred_check_branch
      %39 = sbr.rel (0) target = $region17
    $region16: #{tpu_custom_call.1} parent=1 // pred_region
      %41 = dma.done [#allocation3], 256
    $region17: #{tpu_custom_call.1} parent=1 // pred_fallthru
      _
    // Predicated region
    $region18: #{tpu_custom_call.1} parent=1 // pred_check
      _
    $region19: #{tpu_custom_call.1} parent=1 // pred_check_branch
      %43 = sbr.rel (0) target = $region21
    $region20: #{tpu_custom_call.1} parent=1 // pred_region
      %45 = dma.done [#allocation5], 64
    $region21: #{tpu_custom_call.1} parent=1 // pred_fallthru
      _
    %v46 = vld [vmem:[#allocation2] sm:$0xff]
    %v47 = vld [vmem:[#allocation2 + $0x8] sm:$0xff]
    %v48 = vld [vmem:[#allocation4] sm:$0xf]
    %v49 = vld [vmem:[%s2] sm:$0x1]
    %vm50 = vcmask 261120
    %v52 = vsel %vm50, %v46, 0
    %v55 = vsel %vm50, %v47, 0
    %v58 = vsel %vm50, %v48, 0
    %60 = vmatpush.xpose.msra.mxu0 0.0
    %61 = vmatpush.xpose.msra.mxu0 0.0
    %62 = vmatpush.xpose.msra.mxu0 0.0
    %63 = vmatpush.xpose.msra.mxu0 0.0
    %64 = vmatpush.xpose.msra.mxu0 0.0
    %65 = vmatpush.xpose.msra.mxu0 0.0
    %66 = vmatpush.xpose.msra.mxu0 0.0
    %67 = vmatpush.xpose.msra.mxu0 0.0
    %68 = vmatpush.xpose.msra.mxu0 0.0
    %69 = vmatpush.xpose.msra.mxu0 0.0
    %70 = vmatpush.xpose.msra.mxu0 0.0
    %71 = vmatpush.xpose.msra.mxu0 0.0
    %72 = vmatpush.xpose.msra.mxu0 0.0
    %73 = vmatpush.xpose.msra.mxu0 0.0
    %74 = vmatpush.xpose.msra.mxu0 0.0
    %75 = vmatpush.xpose.msra.mxu0 %v58
    %76 = vmatmul.f32.gmra.mxu0 %v52
    %v77 = vpop.f32.mrf.mxu0
    %v78 = vadd.f32 0.0, %v77
    %79 = vmatmul.f32.gmra.mxu0 %v55
    %v80 = vpop.f32.mrf.mxu0
    %v81 = vadd.f32 0.0, %v80
    %82 = vdwg.mxu0
    %v83 = vmul.f32 %v46, %v46
    %v84 = vmul.f32 %v47, %v47
    %v85 = vsel %vm50, %v83, 0.0
    %86 = vadd.xlane.f32.xlu0 %v85
    %v87 = vpop.xlane.xlu0 %86
    %v88 = vsel %vm50, %v84, 0.0
    %89 = vadd.xlane.f32.xlu0 %v88
    %v90 = vpop.xlane.xlu0 %89
    %v91 = vsel %vm50, %v46, 0.0
    %92 = vadd.xlane.f32.xlu0 %v91
    %v93 = vpop.xlane.xlu0 %92
    %v94 = vsel %vm50, %v47, 0.0
    %95 = vadd.xlane.f32.xlu0 %v94
    %v96 = vpop.xlane.xlu0 %95
    %v98 = vperm.slane %v49, 0
    %v100 = vadd.f32 %v87, %v98
    %v101 = vadd.f32 %v90, %v98
    %v102 = vmul.f32 %v78, 2.0
    %v103 = vmul.f32 %v81, 2.0
    %v104 = vsub.f32 %v100, %v102
    %v105 = vsub.f32 %v101, %v103
    %v106 = vmax.f32 %v104, 1e-12
    %v107 = vmax.f32 %v105, 1e-12
    %v108 = vrsqrt.pop %v106
    %v109 = vmul.f32 %v108, %v106
    %v110 = vmul.f32 %v109, %v108
    %v111 = vmul.f32 0.5, %v110
    %v112 = vsub.f32 1.5, %v111
    %v113 = vmul.f32 %v108, %v112
    %v114 = vmul.f32 %v106, %v113
    %vm115 = vcmp.eq.f32.partialorder %v106, inf
    %v116 = vsel %vm115, %v106, %v114
    %vm117 = vcmp.eq.f32.partialorder %v106, 0.0
    %v118 = vand.u32 %v106, 2147483648
    %v119 = vsel %vm117, %v118, %v116
    %v120 = vrsqrt.pop %v107
    %v121 = vmul.f32 %v120, %v107
    %v122 = vmul.f32 %v121, %v120
    %v123 = vmul.f32 0.5, %v122
    %v124 = vsub.f32 1.5, %v123
    %v125 = vmul.f32 %v120, %v124
    %v126 = vmul.f32 %v107, %v125
    %vm127 = vcmp.eq.f32.partialorder %v107, inf
    %v128 = vsel %vm127, %v107, %v126
    %vm129 = vcmp.eq.f32.partialorder %v107, 0.0
    %v130 = vand.u32 %v107, 2147483648
    %v131 = vsel %vm129, %v130, %v128
    %vm132 = vcmask 31744
    %v133 = vsel %vm132, %v119, inf
    %134 = vmin.xlane.f32.xlu0 %v133
    %v135 = vpop.xlane.xlu0 %134
    %v136 = vsel %vm132, %v131, inf
    %137 = vmin.xlane.f32.xlu0 %v136
    %v138 = vpop.xlane.xlu0 %137
    %v139 = vlaneseq
    %v140 = vand.u32 %v139, 127
    %vm141 = vcmp.eq.f32.partialorder %v119, %v135
    %vm142 = vcmp.eq.f32.partialorder %v131, %v138
    %v143 = vsel %vm141, %v140, 4
    %v144 = vsel %vm142, %v140, 4
    %v145 = vsel %vm132, %v143, 2147483647
    %v146 = vand.u32 %v145, 65535
    %v147 = vshra.s32 %v145, 16
    %v148 = vcvt.s32.f32 %v146
    %v149 = vcvt.s32.f32 %v147
    %150 = vmin.xlane.f32.xlu0 %v149
    %v151 = vpop.xlane.xlu0 %150
    %vm152 = vcmp.eq.f32.partialorder %v149, %v151
    %v153 = vsel %vm152, %v148, inf
    %154 = vmin.xlane.f32.xlu0 %v153
    %v155 = vpop.xlane.xlu0 %154
    %v156 = vcvt.f32.s32 %v155
    %v157 = vcvt.f32.s32 %v151
    %v158 = vshll.u32 %v157, 16
    %v159 = vadd.s32 %v158, %v156
    %v160 = vsel %vm132, %v144, 2147483647
    %v161 = vand.u32 %v160, 65535
    %v162 = vshra.s32 %v160, 16
    %v163 = vcvt.s32.f32 %v161
    %v164 = vcvt.s32.f32 %v162
    %165 = vmin.xlane.f32.xlu0 %v164
    %v166 = vpop.xlane.xlu0 %165
    %vm167 = vcmp.eq.f32.partialorder %v164, %v166
    %v168 = vsel %vm167, %v163, inf
    %169 = vmin.xlane.f32.xlu0 %v168
    %v170 = vpop.xlane.xlu0 %169
    %v171 = vcvt.f32.s32 %v170
    %v172 = vcvt.f32.s32 %v166
    %v173 = vshll.u32 %v172, 16
    %v174 = vadd.s32 %v173, %v171
    %175 = vst.msk [vmem:[%s3] sm:$0xff] %vm132, %v78
    %176 = vst.msk [vmem:[%s3 + $0x8] sm:$0xff] %vm132, %v81
    %v177 = vcvt.s32.f32 %v159
    %v178 = vcvt.s32.f32 %v174
    %vm179 = vcmask 7168
    %v180 = vsel %vm179, %v87, %v93
    %v181 = vsel %vm179, %v90, %v96
    %vm182 = vcmask 15360
    %v183 = vsel %vm182, %v180, %v135
    %v184 = vsel %vm182, %v181, %v138
    %vm185 = vcmask 23552
    %v186 = vsel %vm185, %v183, %v177
    %v187 = vsel %vm185, %v184, %v178
    %188 = vst.msk [vmem:[%s4] sm:$0xff] %vm132, %v186
    %189 = vst.msk [vmem:[%s4 + $0x8] sm:$0xff] %vm132, %v187
    // Predicated region
    $region22: #{tpu_custom_call.1} parent=1 // pred_check
      _
    $region23: #{tpu_custom_call.1} parent=1 // pred_check_branch
      %191 = sbr.rel (0) target = $region25
    $region24: #{tpu_custom_call.1} parent=1 // pred_region
      _
    $region25: #{tpu_custom_call.1} parent=1 // pred_fallthru
      _
    // Predicated region
    $region26: #{tpu_custom_call.1} parent=1 // pred_check
      _
    $region27: #{tpu_custom_call.1} parent=1 // pred_check_branch
      %193 = sbr.rel (0) target = $region29
    $region28: #{tpu_custom_call.1} parent=1 // pred_region
      _
    $region29: #{tpu_custom_call.1} parent=1 // pred_fallthru
      _
    // Predicated region
    $region30: #{tpu_custom_call.1} parent=1 // pred_check
      _
    $region31: #{tpu_custom_call.1} parent=1 // pred_check_branch
      %195 = sbr.rel (0) target = $region33
    $region32: #{tpu_custom_call.1} parent=1 // pred_region
      _
    $region33: #{tpu_custom_call.1} parent=1 // pred_fallthru
      _
    // Predicated region
    $region34: #{tpu_custom_call.1} parent=1 // pred_check
      _
    $region35: #{tpu_custom_call.1} parent=1 // pred_check_branch
      %197 = sbr.rel (0) target = $region37
    $region36: #{tpu_custom_call.1} parent=1 // pred_region
      _
    $region37: #{tpu_custom_call.1} parent=1 // pred_fallthru
      _
    %198 = vsyncpa [#allocation3], 1
    %199 = vsyncpa [#allocation5], 1

</llo_original>
